<compile_context>
chip_gen: v7x
topology: tpu7x:2x2x1
jax: 0.10.0
libtpu: 0.0.40
codegen_flags: <defaults>
</compile_context>

<pallas_src>
import functools

import jax
import jax.numpy as jnp
from jax.experimental import pallas as pl
from jax.experimental.pallas import tpu as pltpu


# ----------------------------------------------------------------------------
# Kernel 1: fused hidden-state compression.
#   Three independent bias-free projections computed in one launch; results
#   are concatenated (plus zero padding) into a single lane-dense output slab
#   [B, ceil(3H/128)*128] so the store path is unmasked.
# ----------------------------------------------------------------------------
def _fused_hn_kernel(x1_ref, x2_ref, x3_ref, w1_ref, w2_ref, w3_ref, o_ref):
    y1 = jnp.dot(x1_ref[...], w1_ref[...], preferred_element_type=jnp.float32)
    y2 = jnp.dot(x2_ref[...], w2_ref[...], preferred_element_type=jnp.float32)
    y3 = jnp.dot(x3_ref[...], w3_ref[...], preferred_element_type=jnp.float32)
    pieces = [y1, y2, y3]
    pad = o_ref.shape[1] - (y1.shape[1] + y2.shape[1] + y3.shape[1])
    if pad > 0:  # static
        pieces.append(jnp.zeros((o_ref.shape[0], pad), jnp.float32))
    o_ref[...] = jnp.concatenate(pieces, axis=-1).astype(o_ref.dtype)


@jax.jit
def fused_compress_hn(x1, x2, x3, w1t, w2t, w3t):
    """x1:[B,L*H], x2:[B,2*L*H], x3:[B,2H]; w*t pre-transposed [K,H].

    Returns (y1, y2, y3), each [B, H]."""
    B = x1.shape[0]
    H = w1t.shape[1]
    n_out = 3 * H
    n_pad = ((n_out + 127) // 128) * 128          # lane-dense output slab
    itemsize = x1.dtype.itemsize
    flops = 2 * B * H * (x1.shape[1] + x2.shape[1] + x3.shape[1])
    bytes_accessed = itemsize * (
        x1.size + x2.size + x3.size + w1t.size + w2t.size + w3t.size + B * n_pad
    )

    full = lambda i: (0, 0)
    out = pl.pallas_call(
        _fused_hn_kernel,
        out_shape=jax.ShapeDtypeStruct((B, n_pad), x1.dtype),
        grid=(1,),
        in_specs=[
            pl.BlockSpec(x1.shape, full),
            pl.BlockSpec(x2.shape, full),
            pl.BlockSpec(x3.shape, full),
            pl.BlockSpec(w1t.shape, full),
            pl.BlockSpec(w2t.shape, full),
            pl.BlockSpec(w3t.shape, full),
        ],
        out_specs=pl.BlockSpec((B, n_pad), full),
        cost_estimate=pl.CostEstimate(
            flops=flops, transcendentals=0, bytes_accessed=bytes_accessed
        ),
        compiler_params=pltpu.CompilerParams(
            dimension_semantics=("arbitrary",)
        ),
    )(x1, x2, x3, w1t, w2t, w3t)
    return out[:, :H], out[:, H:2 * H], out[:, 2 * H:3 * H]


# ----------------------------------------------------------------------------
# Kernel 2: row-tiled bias-free linear for compress_output.
#   y = x @ w_t ;  grid over the M axis (parallel -> megacore on v7x),
#   weight block resident across grid steps.
# ----------------------------------------------------------------------------
def _linear_kernel(x_ref, wt_ref, o_ref):
    o_ref[...] = jnp.dot(
        x_ref[...], wt_ref[...], preferred_element_type=jnp.float32
    ).astype(o_ref.dtype)


@functools.partial(jax.jit, static_argnames=("tm",))
def linear_nobias_rowtiled(x, wt, *, tm=256):
    """x: [M, K], wt: [K, N] (pre-transposed PyTorch weight) -> [M, N]."""
    M, K = x.shape
    K2, N = wt.shape
    assert K == K2, (x.shape, wt.shape)

    tile_m = min(tm, M)
    if tile_m != M:
        tile_m = max(8, (tile_m // 8) * 8)        # respect (8,128) sublane rule
    grid_m = pl.cdiv(M, tile_m)

    itemsize = x.dtype.itemsize
    return pl.pallas_call(
        _linear_kernel,
        out_shape=jax.ShapeDtypeStruct((M, N), x.dtype),
        grid=(grid_m,),
        in_specs=[
            pl.BlockSpec((tile_m, K), lambda i: (i, 0)),
            pl.BlockSpec((K, N), lambda i: (0, 0)),   # weight resident
        ],
        out_specs=pl.BlockSpec((tile_m, N), lambda i: (i, 0)),
        cost_estimate=pl.CostEstimate(
            flops=2 * M * K * N,
            transcendentals=0,
            bytes_accessed=itemsize * (M * K + K * N + M * N),
        ),
        compiler_params=pltpu.CompilerParams(
            dimension_semantics=("parallel",)
        ),
    )(x, wt)


# ----------------------------------------------------------------------------
# Plain-JAX glue: correct flattening of PyTorch hidden state.
#   PyTorch keeps hn as (n_layers*dirs, B, H) (layer-major); flattening to
#   (B, n_layers*dirs*H) requires a permute first — a bare .view would mix
#   batch rows.
# ----------------------------------------------------------------------------
def flatten_hidden(hn):
    L, B, H = hn.shape
    return jnp.transpose(hn, (1, 0, 2)).reshape(B, L * H)


# ----------------------------------------------------------------------------
# BaseRNN parameter container + forward-component methods.
# ----------------------------------------------------------------------------
class BaseRNNPallas:
    def __init__(self, input_size, hidden_size, input_dropout_p, dropout_p,
                 n_layers, rnn_cell, key):
        if rnn_cell.lower() not in ("lstm", "gru"):
            raise ValueError("Unsupported RNN Cell: {}".format(rnn_cell))
        self.vocab_size = input_size
        self.hidden_size = hidden_size
        self.n_layers = n_layers
        self.input_dropout_p = input_dropout_p
        self.dropout_p = dropout_p

        def init_linear_t(k, out_f, in_f):
            # PyTorch nn.Linear default init: U(-1/sqrt(in), 1/sqrt(in)),
            # stored PRE-TRANSPOSED as [in_f, out_f] (cached once; no per-call
            # transpose under jit).
            bound = 1.0 / float(in_f) ** 0.5
            w = jax.random.uniform(
                k, (out_f, in_f), jnp.float32, minval=-bound, maxval=bound
            )
            return jnp.asarray(w.T)  # [K, N]

        k1, k2, k3, k4 = jax.random.split(key, 4)
        H, L = hidden_size, n_layers
        self.wt_compress_hn_layers = init_linear_t(k1, H, L * H)          # [L*H, H]
        self.wt_compress_hn_layers_bi = init_linear_t(k2, H, L * 2 * H)   # [2LH, H]
        self.wt_compress_hn_bi = init_linear_t(k3, H, 2 * H)              # [2H, H]
        self.wt_compress_output = init_linear_t(k4, H, 2 * H)             # [2H, H]

    # dropout (eval mode) == identity
    @staticmethod
    def dropout(x):
        return x

    # --- fused path: all three hidden-state projections in one pallas_call ---
    def compress_hidden_states(self, hn_layers_flat, hn_layers_bi_flat,
                               hn_bi_flat):
        return fused_compress_hn(
            hn_layers_flat, hn_layers_bi_flat, hn_bi_flat,
            self.wt_compress_hn_layers,
            self.wt_compress_hn_layers_bi,
            self.wt_compress_hn_bi,
        )

    # --- individual projections (API parity with the PyTorch submodules) ---
    def compress_hn_layers(self, hn_flat):          # [B, L*H]  -> [B, H]
        return linear_nobias_rowtiled(hn_flat, self.wt_compress_hn_layers, tm=8)

    def compress_hn_layers_bi(self, hn_flat):       # [B, L*2H] -> [B, H]
        return linear_nobias_rowtiled(hn_flat, self.wt_compress_hn_layers_bi, tm=8)

    def compress_hn_bi(self, hn_flat):              # [B, 2H]   -> [B, H]
        return linear_nobias_rowtiled(hn_flat, self.wt_compress_hn_bi, tm=8)

    def compress_output(self, out_flat, *, tm=256):  # [B*S, 2H] -> [B*S, H]
        y = linear_nobias_rowtiled(out_flat, self.wt_compress_output, tm=tm)
        return self.dropout(y)                       # compress_output_dropout

    def forward(self, *args, **kwargs):
        # Faithful to the PyTorch base class.
        raise NotImplementedError()


# ----------------------------------------------------------------------------
# Pure-JAX reference (weights already transposed to [K, N]).
# ----------------------------------------------------------------------------
def _ref_linear_t(x, wt):
    return x.astype(jnp.float32) @ wt.astype(jnp.float32)


if __name__ == "__main__":
    import numpy as np

    key = jax.random.PRNGKey(0)
    kp, kx1, kx2, kx3, kx4 = jax.random.split(key, 5)

    B, S, H, L = 2, 8, 32, 2
    model = BaseRNNPallas(
        input_size=100, hidden_size=H, input_dropout_p=0.1,
        dropout_p=0.1, n_layers=L, rnn_cell="gru", key=kp,
    )

    # Hidden states in PyTorch layout, then correctly flattened (permute+reshape).
    hn_layers = jax.random.normal(kx1, (L, B, H), jnp.float32)          # uni-dir
    hn_layers_bi = jax.random.normal(kx2, (L * 2, B, H), jnp.float32)   # bi-dir
    hn_bi = jax.random.normal(kx3, (2, B, H), jnp.float32)              # last layer bi
    rnn_out = jax.random.normal(kx4, (B * S, 2 * H), jnp.float32)       # (B,S,2H) flat

    hn_layers_f = flatten_hidden(hn_layers)          # [B, L*H]
    hn_layers_bi_f = flatten_hidden(hn_layers_bi)    # [B, 2*L*H]
    hn_bi_f = flatten_hidden(hn_bi)                  # [B, 2*H]

    # Fused kernel for the three tiny projections (input dropout = identity).
    y1, y2, y3 = model.compress_hidden_states(
        model.dropout(hn_layers_f), hn_layers_bi_f, hn_bi_f
    )
    # Row-tiled kernel with a real parallel M-grid for compress_output.
    y4 = model.compress_output(rnn_out, tm=8)        # M=16 -> grid=(2,)

    jax.block_until_ready((y1, y2, y3, y4))

    # Correctness vs pure-JAX reference.
    np.testing.assert_allclose(
        np.asarray(y1), np.asarray(_ref_linear_t(hn_layers_f, model.wt_compress_hn_layers)),
        rtol=1e-5, atol=1e-5)
    np.testing.assert_allclose(
        np.asarray(y2), np.asarray(_ref_linear_t(hn_layers_bi_f, model.wt_compress_hn_layers_bi)),
        rtol=1e-5, atol=1e-5)
    np.testing.assert_allclose(
        np.asarray(y3), np.asarray(_ref_linear_t(hn_bi_f, model.wt_compress_hn_bi)),
        rtol=1e-5, atol=1e-5)
    np.testing.assert_allclose(
        np.asarray(y4), np.asarray(_ref_linear_t(rnn_out, model.wt_compress_output)),
        rtol=1e-5, atol=1e-5)

    # Also check the individual (non-fused) API gives identical results.
    y1b = model.compress_hn_layers(hn_layers_f)
    np.testing.assert_allclose(np.asarray(y1b), np.asarray(y1), rtol=1e-5, atol=1e-5)

    assert y1.shape == (B, H) and y2.shape == (B, H)
    assert y3.shape == (B, H) and y4.shape == (B * S, H)
    assert y1.dtype == jnp.float32 and y4.dtype == jnp.float32

    print("KERNEL_OK")
</pallas_src>

<mosaic_0001>
module attributes {stable_mosaic.version = 11 : i64} {
  func.func @_fused_hn_kernel(%arg0: i32, %arg1: memref<2x64xf32, #tpu.memory_space<vmem>>, %arg2: memref<2x128xf32, #tpu.memory_space<vmem>>, %arg3: memref<2x64xf32, #tpu.memory_space<vmem>>, %arg4: memref<64x32xf32, #tpu.memory_space<vmem>>, %arg5: memref<128x32xf32, #tpu.memory_space<vmem>>, %arg6: memref<64x32xf32, #tpu.memory_space<vmem>>, %arg7: memref<2x128xf32, #tpu.memory_space<vmem>>) attributes {dimension_semantics = [#tpu.dimension_semantics<arbitrary>], iteration_bounds = array<i64: 1>, scalar_prefetch = 0 : i64, scratch_operands = 0 : i64, tpu.core_type = #tpu.core_type<tc>, window_params = [{pipeline_mode = #tpu.pipeline_mode<synchronous>, transform_indices = @transform_0, window_bounds = array<i64: 2, 64>}, {pipeline_mode = #tpu.pipeline_mode<synchronous>, transform_indices = @transform_1, window_bounds = array<i64: 2, 128>}, {pipeline_mode = #tpu.pipeline_mode<synchronous>, transform_indices = @transform_2, window_bounds = array<i64: 2, 64>}, {pipeline_mode = #tpu.pipeline_mode<synchronous>, transform_indices = @transform_3, window_bounds = array<i64: 64, 32>}, {pipeline_mode = #tpu.pipeline_mode<synchronous>, transform_indices = @transform_4, window_bounds = array<i64: 128, 32>}, {pipeline_mode = #tpu.pipeline_mode<synchronous>, transform_indices = @transform_5, window_bounds = array<i64: 64, 32>}, {pipeline_mode = #tpu.pipeline_mode<synchronous>, transform_indices = @transform_6, window_bounds = array<i64: 2, 128>}]} {
    %c0 = arith.constant 0 : index
    %c0_0 = arith.constant 0 : index
    %0 = vector.load %arg1[%c0, %c0_0] : memref<2x64xf32, #tpu.memory_space<vmem>>, vector<2x64xf32>
    %c0_1 = arith.constant 0 : index
    %c0_2 = arith.constant 0 : index
    %1 = vector.load %arg4[%c0_1, %c0_2] : memref<64x32xf32, #tpu.memory_space<vmem>>, vector<64x32xf32>
    %cst = arith.constant dense<0.000000e+00> : vector<2x32xf32>
    %2 = tpu.matmul %0, %1, %cst {dimension_numbers = #tpu.dot_dimension_numbers<[1], [0], [0], [1], [0, 0, 1, 1], [], []>} : vector<2x64xf32>, vector<64x32xf32>, vector<2x32xf32> -> vector<2x32xf32>
    %c0_3 = arith.constant 0 : index
    %c0_4 = arith.constant 0 : index
    %3 = vector.load %arg2[%c0_3, %c0_4] : memref<2x128xf32, #tpu.memory_space<vmem>>, vector<2x128xf32>
    %c0_5 = arith.constant 0 : index
    %c0_6 = arith.constant 0 : index
    %4 = vector.load %arg5[%c0_5, %c0_6] : memref<128x32xf32, #tpu.memory_space<vmem>>, vector<128x32xf32>
    %cst_7 = arith.constant dense<0.000000e+00> : vector<2x32xf32>
    %5 = tpu.matmul %3, %4, %cst_7 {dimension_numbers = #tpu.dot_dimension_numbers<[1], [0], [0], [1], [0, 0, 1, 1], [], []>} : vector<2x128xf32>, vector<128x32xf32>, vector<2x32xf32> -> vector<2x32xf32>
    %c0_8 = arith.constant 0 : index
    %c0_9 = arith.constant 0 : index
    %6 = vector.load %arg3[%c0_8, %c0_9] : memref<2x64xf32, #tpu.memory_space<vmem>>, vector<2x64xf32>
    %c0_10 = arith.constant 0 : index
    %c0_11 = arith.constant 0 : index
    %7 = vector.load %arg6[%c0_10, %c0_11] : memref<64x32xf32, #tpu.memory_space<vmem>>, vector<64x32xf32>
    %cst_12 = arith.constant dense<0.000000e+00> : vector<2x32xf32>
    %8 = tpu.matmul %6, %7, %cst_12 {dimension_numbers = #tpu.dot_dimension_numbers<[1], [0], [0], [1], [0, 0, 1, 1], [], []>} : vector<2x64xf32>, vector<64x32xf32>, vector<2x32xf32> -> vector<2x32xf32>
    %cst_13 = arith.constant 0.000000e+00 : f32
    %9 = vector.broadcast %cst_13 : f32 to vector<2x32xf32>
    %10 = tpu.concatenate %2, %5, %8, %9 in 1 : vector<2x32xf32>, vector<2x32xf32>, vector<2x32xf32>, vector<2x32xf32> -> vector<2x128xf32>
    %c0_14 = arith.constant 0 : index
    %c0_15 = arith.constant 0 : index
    %11 = vector.load %arg7[%c0_14, %c0_15] : memref<2x128xf32, #tpu.memory_space<vmem>>, vector<2x128xf32>
    tpu.vector_store %arg7[%c0_14, %c0_15], %10 {strides = array<i32>} : memref<2x128xf32, #tpu.memory_space<vmem>>, vector<2x128xf32>,
    return
  }
  func.func @transform_0(%arg0: i32) -> (i32, i32) {
    %c0_i32 = arith.constant 0 : i32
    %c0_i32_0 = arith.constant 0 : i32
    %c0_i32_1 = arith.constant 0 : i32
    return %c0_i32, %c0_i32_0 : i32, i32
  }
  func.func @transform_1(%arg0: i32) -> (i32, i32) {
    %c0_i32 = arith.constant 0 : i32
    %c0_i32_0 = arith.constant 0 : i32
    %c0_i32_1 = arith.constant 0 : i32
    return %c0_i32, %c0_i32_0 : i32, i32
  }
  func.func @transform_2(%arg0: i32) -> (i32, i32) {
    %c0_i32 = arith.constant 0 : i32
    %c0_i32_0 = arith.constant 0 : i32
    %c0_i32_1 = arith.constant 0 : i32
    return %c0_i32, %c0_i32_0 : i32, i32
  }
  func.func @transform_3(%arg0: i32) -> (i32, i32) {
    %c0_i32 = arith.constant 0 : i32
    %c0_i32_0 = arith.constant 0 : i32
    %c0_i32_1 = arith.constant 0 : i32
    return %c0_i32, %c0_i32_0 : i32, i32
  }
  func.func @transform_4(%arg0: i32) -> (i32, i32) {
    %c0_i32 = arith.constant 0 : i32
    %c0_i32_0 = arith.constant 0 : i32
    %c0_i32_1 = arith.constant 0 : i32
    return %c0_i32, %c0_i32_0 : i32, i32
  }
  func.func @transform_5(%arg0: i32) -> (i32, i32) {
    %c0_i32 = arith.constant 0 : i32
    %c0_i32_0 = arith.constant 0 : i32
    %c0_i32_1 = arith.constant 0 : i32
    return %c0_i32, %c0_i32_0 : i32, i32
  }
  func.func @transform_6(%arg0: i32) -> (i32, i32) {
    %c0_i32 = arith.constant 0 : i32
    %c0_i32_0 = arith.constant 0 : i32
    %c0_i32_1 = arith.constant 0 : i32
    return %c0_i32, %c0_i32_0 : i32, i32
  }
}

</mosaic_0001>

<llo_original>
// kernel: fused_compress_hn.1
$region0: #{fused_compress_hn.1}
  #allocation0 [shape = 'u32[]', space=smem, size = 0x4, offset = 0x4, fixed_abs, tag = 'smem constant byte address 0x4 - core index']
  #allocation1 [shape = 'u32[144,128]{1,0:T(1,128)}', space=vmem, size = 0x12000, scoped, tag = 'internal scratch']
  %s0 = inlined_call_operand.vmem [shape: f32[2,64], index: 0, kind: input, shape index: {}]
  %s1 = inlined_call_operand.vmem [shape: f32[2,128], index: 1, kind: input, shape index: {}]
  %s2 = inlined_call_operand.vmem [shape: f32[2,64], index: 2, kind: input, shape index: {}]
  %s3 = inlined_call_operand.vmem [shape: f32[64,32], index: 3, kind: input, shape index: {}]
  %s4 = inlined_call_operand.vmem [shape: f32[128,32], index: 4, kind: input, shape index: {}]
  %s5 = inlined_call_operand.vmem [shape: f32[64,32], index: 5, kind: input, shape index: {}]
  %s6 = inlined_call_operand.vmem [shape: f32[2,128], index: 6, kind: output, shape index: {}]
  %s7 = sld [smem:[#allocation0]]
  $region34: #{fused_compress_hn.1} parent=0
    _
  %s9 = ssub.s32 1, %s7
  %s10 = scalar_select 0, %s9, %s7
  // Predicated region
  $region2: #{fused_compress_hn.1} parent=0 // pred_check
    _
  $region3: #{fused_compress_hn.1} parent=0 // pred_check_branch
    %12 = sbr.rel (0) target = $region5
  $region4: #{fused_compress_hn.1} parent=0 // pred_region
    _
  $region5: #{fused_compress_hn.1} parent=0 // pred_fallthru
    _
  // Predicated region
  $region6: #{fused_compress_hn.1} parent=0 // pred_check
    _
  $region7: #{fused_compress_hn.1} parent=0 // pred_check_branch
    %14 = sbr.rel (0) target = $region9
  $region8: #{fused_compress_hn.1} parent=0 // pred_region
    _
  $region9: #{fused_compress_hn.1} parent=0 // pred_fallthru
    _
  // Predicated region
  $region10: #{fused_compress_hn.1} parent=0 // pred_check
    _
  $region11: #{fused_compress_hn.1} parent=0 // pred_check_branch
    %16 = sbr.rel (0) target = $region13
  $region12: #{fused_compress_hn.1} parent=0 // pred_region
    _
  $region13: #{fused_compress_hn.1} parent=0 // pred_fallthru
    _
  // Predicated region
  $region14: #{fused_compress_hn.1} parent=0 // pred_check
    _
  $region15: #{fused_compress_hn.1} parent=0 // pred_check_branch
    %18 = sbr.rel (0) target = $region17
  $region16: #{fused_compress_hn.1} parent=0 // pred_region
    _
  $region17: #{fused_compress_hn.1} parent=0 // pred_fallthru
    _
  // Predicated region
  $region18: #{fused_compress_hn.1} parent=0 // pred_check
    _
  $region19: #{fused_compress_hn.1} parent=0 // pred_check_branch
    %20 = sbr.rel (0) target = $region21
  $region20: #{fused_compress_hn.1} parent=0 // pred_region
    _
  $region21: #{fused_compress_hn.1} parent=0 // pred_fallthru
    _
  // Predicated region
  $region22: #{fused_compress_hn.1} parent=0 // pred_check
    _
  $region23: #{fused_compress_hn.1} parent=0 // pred_check_branch
    %22 = sbr.rel (0) target = $region25
  $region24: #{fused_compress_hn.1} parent=0 // pred_region
    _
  $region25: #{fused_compress_hn.1} parent=0 // pred_fallthru
    _
  %v23 = vld [vmem:[%s0] sm:$0x3]
  %v24 = vld [vmem:[%s3] sm:$0xff]
  %v25 = vld [vmem:[%s3 + $0x8] sm:$0xff]
  %v26 = vld [vmem:[%s3 + $0x10] sm:$0xff]
  %v27 = vld [vmem:[%s3 + $0x18] sm:$0xff]
  %v28 = vld [vmem:[%s3 + $0x20] sm:$0xff]
  %v29 = vld [vmem:[%s3 + $0x28] sm:$0xff]
  %v30 = vld [vmem:[%s3 + $0x30] sm:$0xff]
  %v31 = vld [vmem:[%s3 + $0x38] sm:$0xff]
  %vm32 = vcmask 523264
  %v34 = vsel %vm32, %v23, 0
  %36 = vmatprep.subr.mxu0 0.0
  %37 = vmatpush1.msra.mxu0 %v24
  %38 = vmatprep.subr.mxu0 0.0
  %39 = vmatpush1.msra.mxu0 %v25
  %40 = vmatprep.subr.mxu0 0.0
  %41 = vmatpush1.msra.mxu0 %v26
  %42 = vmatprep.subr.mxu0 0.0
  %43 = vmatpush1.msra.mxu0 %v27
  %44 = vmatprep.subr.mxu0 0.0
  %45 = vmatpush1.msra.mxu0 %v28
  %46 = vmatprep.subr.mxu0 0.0
  %47 = vmatpush1.msra.mxu0 %v29
  %48 = vmatprep.subr.mxu0 0.0
  %49 = vmatpush1.msra.mxu0 %v30
  %50 = vmatprep.subr.mxu0 0.0
  %51 = vmatpush1.msra.mxu0 %v31
  %52 = vmatprep.subr.mxu0 0.0
  %53 = vmatpush1.msra.mxu0 0.0
  %54 = vmatprep.subr.mxu0 0.0
  %55 = vmatpush1.msra.mxu0 0.0
  %56 = vmatprep.subr.mxu0 0.0
  %57 = vmatpush1.msra.mxu0 0.0
  %58 = vmatprep.subr.mxu0 0.0
  %59 = vmatpush1.msra.mxu0 0.0
  %60 = vmatprep.subr.mxu0 0.0
  %61 = vmatpush1.msra.mxu0 0.0
  %62 = vmatprep.subr.mxu0 0.0
  %63 = vmatpush1.msra.mxu0 0.0
  %64 = vmatprep.subr.mxu0 0.0
  %65 = vmatpush1.msra.mxu0 0.0
  %66 = vmatprep.subr.mxu0 0.0
  %67 = vmatpush1.msra.mxu0 0.0
  %68 = vmatprep.subr.mxu0 0.0
  %69 = vmatpush1.msra.mxu0 0.0
  %70 = vmatprep.subr.mxu0 0.0
  %71 = vmatpush1.msra.mxu0 0.0
  %72 = vmatprep.subr.mxu0 0.0
  %73 = vmatpush1.msra.mxu0 0.0
  %74 = vmatprep.subr.mxu0 0.0
  %75 = vmatpush1.msra.mxu0 0.0
  %76 = vmatprep.subr.mxu0 0.0
  %77 = vmatpush1.msra.mxu0 0.0
  %78 = vmatprep.subr.mxu0 0.0
  %79 = vmatpush1.msra.mxu0 0.0
  %80 = vmatprep.subr.mxu0 0.0
  %81 = vmatpush1.msra.mxu0 0.0
  %82 = vmatprep.subr.mxu0 0.0
  %83 = vmatpush1.msra.mxu0 0.0
  %84 = vmatprep.subr.mxu0 0.0
  %85 = vmatpush1.msra.mxu0 0.0
  %86 = vmatprep.subr.mxu0 0.0
  %87 = vmatpush1.msra.mxu0 0.0
  %88 = vmatprep.subr.mxu0 0.0
  %89 = vmatpush1.msra.mxu0 0.0
  %90 = vmatprep.subr.mxu0 0.0
  %91 = vmatpush1.msra.mxu0 0.0
  %92 = vmatprep.subr.mxu0 0.0
  %93 = vmatpush1.msra.mxu0 0.0
  %94 = vmatprep.subr.mxu0 0.0
  %95 = vmatpush1.msra.mxu0 0.0
  %96 = vmatprep.subr.mxu0 0.0
  %97 = vmatpush1.msra.mxu0 0.0
  %98 = vmatprep.subr.mxu0 0.0
  %99 = vmatpush1.msra.mxu0 0.0
  %100 = vmatprep.mubr.f32.mxu0 0.0
  %101 = vmatmul.mubr.f32.gmra.mrb[0].mxu0 %v34
  %v102 = vpop.f32.mrb[0].mxu0
  %v103 = vadd.f32 0.0, %v102
  %v104 = vpop.f32.mrb[0].mxu0
  %105 = vdwg.mxu0
  %v106 = vld [vmem:[%s1] sm:$0x3]
  %v107 = vld [vmem:[%s4] sm:$0xff]
  %v108 = vld [vmem:[%s4 + $0x8] sm:$0xff]
  %v109 = vld [vmem:[%s4 + $0x10] sm:$0xff]
  %v110 = vld [vmem:[%s4 + $0x18] sm:$0xff]
  %v111 = vld [vmem:[%s4 + $0x20] sm:$0xff]
  %v112 = vld [vmem:[%s4 + $0x28] sm:$0xff]
  %v113 = vld [vmem:[%s4 + $0x30] sm:$0xff]
  %v114 = vld [vmem:[%s4 + $0x38] sm:$0xff]
  %v115 = vld [vmem:[%s4 + $0x40] sm:$0xff]
  %v116 = vld [vmem:[%s4 + $0x48] sm:$0xff]
  %v117 = vld [vmem:[%s4 + $0x50] sm:$0xff]
  %v118 = vld [vmem:[%s4 + $0x58] sm:$0xff]
  %v119 = vld [vmem:[%s4 + $0x60] sm:$0xff]
  %v120 = vld [vmem:[%s4 + $0x68] sm:$0xff]
  %v121 = vld [vmem:[%s4 + $0x70] sm:$0xff]
  %v122 = vld [vmem:[%s4 + $0x78] sm:$0xff]
  %123 = vmatprep.subr.mxu0 0.0
  %124 = vmatpush1.msra.mxu0 %v107
  %125 = vmatprep.subr.mxu0 0.0
  %126 = vmatpush1.msra.mxu0 %v108
  %127 = vmatprep.subr.mxu0 0.0
  %128 = vmatpush1.msra.mxu0 %v109
  %129 = vmatprep.subr.mxu0 0.0
  %130 = vmatpush1.msra.mxu0 %v110
  %131 = vmatprep.subr.mxu0 0.0
  %132 = vmatpush1.msra.mxu0 %v111
  %133 = vmatprep.subr.mxu0 0.0
  %134 = vmatpush1.msra.mxu0 %v112
  %135 = vmatprep.subr.mxu0 0.0
  %136 = vmatpush1.msra.mxu0 %v113
  %137 = vmatprep.subr.mxu0 0.0
  %138 = vmatpush1.msra.mxu0 %v114
  %139 = vmatprep.subr.mxu0 0.0
  %140 = vmatpush1.msra.mxu0 %v115
  %141 = vmatprep.subr.mxu0 0.0
  %142 = vmatpush1.msra.mxu0 %v116
  %143 = vmatprep.subr.mxu0 0.0
  %144 = vmatpush1.msra.mxu0 %v117
  %145 = vmatprep.subr.mxu0 0.0
  %146 = vmatpush1.msra.mxu0 %v118
  %147 = vmatprep.subr.mxu0 0.0
  %148 = vmatpush1.msra.mxu0 %v119
  %149 = vmatprep.subr.mxu0 0.0
  %150 = vmatpush1.msra.mxu0 %v120
  %151 = vmatprep.subr.mxu0 0.0
  %152 = vmatpush1.msra.mxu0 %v121
  %153 = vmatprep.subr.mxu0 0.0
  %154 = vmatpush1.msra.mxu0 %v122
  %155 = vmatprep.subr.mxu0 0.0
  %156 = vmatpush1.msra.mxu0 0.0
  %157 = vmatprep.subr.mxu0 0.0
  %158 = vmatpush1.msra.mxu0 0.0
  %159 = vmatprep.subr.mxu0 0.0
  %160 = vmatpush1.msra.mxu0 0.0
  %161 = vmatprep.subr.mxu0 0.0
  %162 = vmatpush1.msra.mxu0 0.0
  %163 = vmatprep.subr.mxu0 0.0
  %164 = vmatpush1.msra.mxu0 0.0
  %165 = vmatprep.subr.mxu0 0.0
  %166 = vmatpush1.msra.mxu0 0.0
  %167 = vmatprep.subr.mxu0 0.0
  %168 = vmatpush1.msra.mxu0 0.0
  %169 = vmatprep.subr.mxu0 0.0
  %170 = vmatpush1.msra.mxu0 0.0
  %171 = vmatprep.subr.mxu0 0.0
  %172 = vmatpush1.msra.mxu0 0.0
  %173 = vmatprep.subr.mxu0 0.0
  %174 = vmatpush1.msra.mxu0 0.0
  %175 = vmatprep.subr.mxu0 0.0
  %176 = vmatpush1.msra.mxu0 0.0
  %177 = vmatprep.subr.mxu0 0.0
  %178 = vmatpush1.msra.mxu0 0.0
  %179 = vmatprep.subr.mxu0 0.0
  %180 = vmatpush1.msra.mxu0 0.0
  %181 = vmatprep.subr.mxu0 0.0
  %182 = vmatpush1.msra.mxu0 0.0
  %183 = vmatprep.subr.mxu0 0.0
  %184 = vmatpush1.msra.mxu0 0.0
  %185 = vmatprep.subr.mxu0 0.0
  %186 = vmatpush1.msra.mxu0 0.0
  %187 = vmatprep.mubr.f32.mxu0 0.0
  %188 = vmatmul.mubr.f32.gmra.mrb[0].mxu0 %v106
  %v189 = vpop.f32.mrb[0].mxu0
  %v190 = vadd.f32 0.0, %v189
  %v191 = vpop.f32.mrb[0].mxu0
  %192 = vdwg.mxu0
  %v193 = vld [vmem:[%s2] sm:$0x3]
  %v194 = vld [vmem:[%s5] sm:$0xff]
  %v195 = vld [vmem:[%s5 + $0x8] sm:$0xff]
  %v196 = vld [vmem:[%s5 + $0x10] sm:$0xff]
  %v197 = vld [vmem:[%s5 + $0x18] sm:$0xff]
  %v198 = vld [vmem:[%s5 + $0x20] sm:$0xff]
  %v199 = vld [vmem:[%s5 + $0x28] sm:$0xff]
  %v200 = vld [vmem:[%s5 + $0x30] sm:$0xff]
  %v201 = vld [vmem:[%s5 + $0x38] sm:$0xff]
  %v203 = vsel %vm32, %v193, 0
  %205 = vmatprep.subr.mxu0 0.0
  %206 = vmatpush1.msra.mxu0 %v194
  %207 = vmatprep.subr.mxu0 0.0
  %208 = vmatpush1.msra.mxu0 %v195
  %209 = vmatprep.subr.mxu0 0.0
  %210 = vmatpush1.msra.mxu0 %v196
  %211 = vmatprep.subr.mxu0 0.0
  %212 = vmatpush1.msra.mxu0 %v197
  %213 = vmatprep.subr.mxu0 0.0
  %214 = vmatpush1.msra.mxu0 %v198
  %215 = vmatprep.subr.mxu0 0.0
  %216 = vmatpush1.msra.mxu0 %v199
  %217 = vmatprep.subr.mxu0 0.0
  %218 = vmatpush1.msra.mxu0 %v200
  %219 = vmatprep.subr.mxu0 0.0
  %220 = vmatpush1.msra.mxu0 %v201
  %221 = vmatprep.subr.mxu0 0.0
  %222 = vmatpush1.msra.mxu0 0.0
  %223 = vmatprep.subr.mxu0 0.0
  %224 = vmatpush1.msra.mxu0 0.0
  %225 = vmatprep.subr.mxu0 0.0
  %226 = vmatpush1.msra.mxu0 0.0
  %227 = vmatprep.subr.mxu0 0.0
  %228 = vmatpush1.msra.mxu0 0.0
  %229 = vmatprep.subr.mxu0 0.0
  %230 = vmatpush1.msra.mxu0 0.0
  %231 = vmatprep.subr.mxu0 0.0
  %232 = vmatpush1.msra.mxu0 0.0
  %233 = vmatprep.subr.mxu0 0.0
  %234 = vmatpush1.msra.mxu0 0.0
  %235 = vmatprep.subr.mxu0 0.0
  %236 = vmatpush1.msra.mxu0 0.0
  %237 = vmatprep.subr.mxu0 0.0
  %238 = vmatpush1.msra.mxu0 0.0
  %239 = vmatprep.subr.mxu0 0.0
  %240 = vmatpush1.msra.mxu0 0.0
  %241 = vmatprep.subr.mxu0 0.0
  %242 = vmatpush1.msra.mxu0 0.0
  %243 = vmatprep.subr.mxu0 0.0
  %244 = vmatpush1.msra.mxu0 0.0
  %245 = vmatprep.subr.mxu0 0.0
  %246 = vmatpush1.msra.mxu0 0.0
  %247 = vmatprep.subr.mxu0 0.0
  %248 = vmatpush1.msra.mxu0 0.0
  %249 = vmatprep.subr.mxu0 0.0
  %250 = vmatpush1.msra.mxu0 0.0
  %251 = vmatprep.subr.mxu0 0.0
  %252 = vmatpush1.msra.mxu0 0.0
  %253 = vmatprep.subr.mxu0 0.0
  %254 = vmatpush1.msra.mxu0 0.0
  %255 = vmatprep.subr.mxu0 0.0
  %256 = vmatpush1.msra.mxu0 0.0
  %257 = vmatprep.subr.mxu0 0.0
  %258 = vmatpush1.msra.mxu0 0.0
  %259 = vmatprep.subr.mxu0 0.0
  %260 = vmatpush1.msra.mxu0 0.0
  %261 = vmatprep.subr.mxu0 0.0
  %262 = vmatpush1.msra.mxu0 0.0
  %263 = vmatprep.subr.mxu0 0.0
  %264 = vmatpush1.msra.mxu0 0.0
  %265 = vmatprep.subr.mxu0 0.0
  %266 = vmatpush1.msra.mxu0 0.0
  %267 = vmatprep.subr.mxu0 0.0
  %268 = vmatpush1.msra.mxu0 0.0
  %269 = vmatprep.mubr.f32.mxu0 0.0
  %270 = vmatmul.mubr.f32.gmra.mrb[0].mxu0 %v203
  %v271 = vpop.f32.mrb[0].mxu0
  %v272 = vadd.f32 0.0, %v271
  %v273 = vpop.f32.mrb[0].mxu0
  %274 = vdwg.mxu0
  %276 = vrot.lane.b32.xlu0 %v190, 32
  %v277 = vpop.permute.xlu0 %276
  %280 = vrot.lane.b32.xlu0 %v272, 64
  %v281 = vpop.permute.xlu0 %280
  %vm283 = vcmask 261120
  %v284 = vsel %vm283, %v103, %v277
  %v285 = vsel %vm32, %v284, %v281
  %vm286 = vcmask 785408
  %v287 = vsel %vm286, %v285, 0.0
  %288 = vst [vmem:[%s6] sm:$0x3] %v287
  // Predicated region
  $region26: #{fused_compress_hn.1} parent=0 // pred_check
    _
  $region27: #{fused_compress_hn.1} parent=0 // pred_check_branch
    %290 = sbr.rel (0) target = $region29
  $region28: #{fused_compress_hn.1} parent=0 // pred_region
    _
  $region29: #{fused_compress_hn.1} parent=0 // pred_fallthru
    _
  // Predicated region
  $region30: #{fused_compress_hn.1} parent=0 // pred_check
    _
  $region31: #{fused_compress_hn.1} parent=0 // pred_check_branch
    %292 = sbr.rel (0) target = $region33
  $region32: #{fused_compress_hn.1} parent=0 // pred_region
    _
  $region33: #{fused_compress_hn.1} parent=0 // pred_fallthru
    _

</llo_original>
